<compile_context>
chip_gen: v7x
topology: tpu7x:2x2x1
jax: 0.10.0
libtpu: 0.0.40
codegen_flags: <defaults>
</compile_context>

<pallas_src>
import functools
import math

import jax
import jax.numpy as jnp
import numpy as np
from jax import lax
from jax.experimental import pallas as pl
from jax.experimental.pallas import tpu as pltpu


def _qkv_attention_kernel(q_ref, k_ref, v_ref, o_ref, *, scale):
    """One grid step: attention over a block of (batch*head) slices.

    Block shapes: q/k/v/o are (BH_BLK, C, T); lane dim = T, sublane dim = C.
    """
    in_dtype = q_ref.dtype
    s = jnp.asarray(scale, in_dtype)

    # Scale q and k in the input dtype (matches the PyTorch reference).
    q = q_ref[...] * s                      # (B, C, T)
    k = k_ref[...] * s                      # (B, C, T)

    # weight[b, t, s] = sum_c q[b, c, t] * k[b, c, s]  -> (B, T, T), f32 accum.
    w = lax.dot_general(
        q, k,
        dimension_numbers=(((1,), (1,)), ((0,), (0,))),
        preferred_element_type=jnp.float32,
    )

    # Numerically-stable softmax over the key axis (last / lane axis), in f32.
    w = w - jnp.max(w, axis=-1, keepdims=True)
    p = jnp.exp(w)
    p = p / jnp.sum(p, axis=-1, keepdims=True)
    p = p.astype(in_dtype)                  # matches `.type(weight.dtype)`

    # a[b, c, t] = sum_s v[b, c, s] * p[b, t, s]  -> (B, C, T): lane-dense in T.
    a = lax.dot_general(
        v_ref[...], p,
        dimension_numbers=(((2,), (2,)), ((0,), (0,))),
        preferred_element_type=jnp.float32,
    )
    o_ref[...] = a.astype(o_ref.dtype)


def _pick_bh_block(n_bh, ch, length, itemsize,
                   vmem_budget_bytes=4 * 1024 * 1024):
    """Pick how many (batch*head) slices to process per grid step.

    Keeps the per-step working set (q/k/v/out blocks + f32 softmax temps)
    under a VMEM budget while preferring >= 2 grid steps so the 'parallel'
    axis can be split across the two TensorCores on v7x.
    """
    per_head = 4 * ch * length * itemsize + 3 * length * length * 4
    max_blk = max(1, vmem_budget_bytes // max(per_head, 1))
    divisors = [d for d in range(1, n_bh + 1) if n_bh % d == 0 and d <= max_blk]
    for d in reversed(divisors):          # largest first
        if n_bh // d >= 2:
            return d
    return divisors[-1]


def qkv_attention(qkv, n_heads):
    """Pallas QKV attention. qkv: (N, 3*H*C, T) -> (N, H*C, T)."""
    bs, width, length = qkv.shape
    assert width % (3 * n_heads) == 0
    ch = width // (3 * n_heads)
    scale = 1.0 / math.sqrt(math.sqrt(ch))

    n_bh = bs * n_heads
    # dim 1 of qkv is laid out [q|k|v] x [head] x [channel]
    r = qkv.reshape(bs, 3, n_heads, ch, length)
    q = r[:, 0].reshape(n_bh, ch, length)
    k = r[:, 1].reshape(n_bh, ch, length)
    v = r[:, 2].reshape(n_bh, ch, length)

    bh_blk = _pick_bh_block(n_bh, ch, length, qkv.dtype.itemsize)
    grid = (n_bh // bh_blk,)

    spec = pl.BlockSpec((bh_blk, ch, length), lambda i: (i, 0, 0))

    out = pl.pallas_call(
        functools.partial(_qkv_attention_kernel, scale=scale),
        out_shape=jax.ShapeDtypeStruct((n_bh, ch, length), qkv.dtype),
        grid=grid,
        in_specs=[spec, spec, spec],
        out_specs=spec,
        compiler_params=pltpu.CompilerParams(
            dimension_semantics=("parallel",),
            vmem_limit_bytes=48 * 1024 * 1024,   # fits v7x's 64 MiB/TC
        ),
    )(q, k, v)

    return out.reshape(bs, n_heads * ch, length)


def qkv_attention_reference(qkv, n_heads):
    """Pure-JAX reference mirroring the PyTorch forward exactly."""
    bs, width, length = qkv.shape
    ch = width // (3 * n_heads)
    scale = 1.0 / math.sqrt(math.sqrt(ch))
    q, k, v = jnp.split(qkv, 3, axis=1)
    q = (q * scale).reshape(bs * n_heads, ch, length)
    k = (k * scale).reshape(bs * n_heads, ch, length)
    v = v.reshape(bs * n_heads, ch, length)
    w = jnp.einsum('bct,bcs->bts', q, k, precision=jax.lax.Precision.HIGHEST)
    w = jax.nn.softmax(w.astype(jnp.float32), axis=-1).astype(w.dtype)
    a = jnp.einsum('bts,bcs->bct', w, v, precision=jax.lax.Precision.HIGHEST)
    return a.reshape(bs, -1, length)


if __name__ == "__main__":
    # Small deterministic example: N=2, heads=2, ch=32, T=128.
    # T=128 keeps the last (lane) dim full-width -> unmasked vector stores.
    key = jax.random.PRNGKey(0)
    bs, n_heads, ch, length = 2, 2, 32, 128
    qkv = jax.random.normal(
        key, (bs, 3 * n_heads * ch, length), dtype=jnp.float32)

    out = qkv_attention(qkv, n_heads)
    out = jax.block_until_ready(out)

    ref = qkv_attention_reference(qkv, n_heads)
    np.testing.assert_allclose(np.asarray(out), np.asarray(ref),
                               rtol=1e-4, atol=1e-4)
    print("KERNEL_OK")
</pallas_src>

<mosaic_0001>
module attributes {stable_mosaic.version = 11 : i64} {
  func.func @_qkv_attention_kernel(%arg0: i32, %arg1: memref<2x32x128xf32, #tpu.memory_space<vmem>>, %arg2: memref<2x32x128xf32, #tpu.memory_space<vmem>>, %arg3: memref<2x32x128xf32, #tpu.memory_space<vmem>>, %arg4: memref<2x32x128xf32, #tpu.memory_space<vmem>>) attributes {dimension_semantics = [#tpu.dimension_semantics<parallel>], iteration_bounds = array<i64: 2>, scalar_prefetch = 0 : i64, scratch_operands = 0 : i64, tpu.core_type = #tpu.core_type<tc>, window_params = [{transform_indices = @transform_0, window_bounds = array<i64: 2, 32, 128>}, {transform_indices = @transform_1, window_bounds = array<i64: 2, 32, 128>}, {transform_indices = @transform_2, window_bounds = array<i64: 2, 32, 128>}, {transform_indices = @transform_3, window_bounds = array<i64: 2, 32, 128>}]} {
    %c0 = arith.constant 0 : index
    %c0_0 = arith.constant 0 : index
    %c0_1 = arith.constant 0 : index
    %0 = vector.load %arg1[%c0, %c0_0, %c0_1] : memref<2x32x128xf32, #tpu.memory_space<vmem>>, vector<2x32x128xf32>
    %cst = arith.constant 0.420448214 : f32
    %1 = vector.broadcast %cst : f32 to vector<2x32x128xf32>
    %2 = arith.mulf %0, %1 : vector<2x32x128xf32>
    %c0_2 = arith.constant 0 : index
    %c0_3 = arith.constant 0 : index
    %c0_4 = arith.constant 0 : index
    %3 = vector.load %arg2[%c0_2, %c0_3, %c0_4] : memref<2x32x128xf32, #tpu.memory_space<vmem>>, vector<2x32x128xf32>
    %cst_5 = arith.constant 0.420448214 : f32
    %4 = vector.broadcast %cst_5 : f32 to vector<2x32x128xf32>
    %5 = arith.mulf %3, %4 : vector<2x32x128xf32>
    %cst_6 = arith.constant dense<0.000000e+00> : vector<2x128x128xf32>
    %6 = tpu.matmul %2, %5, %cst_6 {dimension_numbers = #tpu.dot_dimension_numbers<[1], [1], [2], [2], [0, 0, 0, 2, 1, 2], [0], [0]>} : vector<2x32x128xf32>, vector<2x32x128xf32>, vector<2x128x128xf32> -> vector<2x128x128xf32>
    %cst_7 = arith.constant dense<0xFF800000> : vector<2x128xf32>
    %7 = vector.multi_reduction <maximumf>, %6, %cst_7 [2] : vector<2x128x128xf32> to vector<2x128xf32>
    %8 = vector.shape_cast %7 : vector<2x128xf32> to vector<2x128x1xf32>
    %9 = vector.broadcast %8 : vector<2x128x1xf32> to vector<2x128x128xf32>
    %10 = arith.subf %6, %9 : vector<2x128x128xf32>
    %11 = math.exp %10 : vector<2x128x128xf32>
    %cst_8 = arith.constant dense<0.000000e+00> : vector<2x128xf32>
    %12 = vector.multi_reduction <add>, %11, %cst_8 [2] : vector<2x128x128xf32> to vector<2x128xf32>
    %13 = vector.shape_cast %12 : vector<2x128xf32> to vector<2x128x1xf32>
    %14 = vector.broadcast %13 : vector<2x128x1xf32> to vector<2x128x128xf32>
    %15 = arith.divf %11, %14 : vector<2x128x128xf32>
    %c0_9 = arith.constant 0 : index
    %c0_10 = arith.constant 0 : index
    %c0_11 = arith.constant 0 : index
    %16 = vector.load %arg3[%c0_9, %c0_10, %c0_11] : memref<2x32x128xf32, #tpu.memory_space<vmem>>, vector<2x32x128xf32>
    %cst_12 = arith.constant dense<0.000000e+00> : vector<2x32x128xf32>
    %17 = tpu.matmul %16, %15, %cst_12 {dimension_numbers = #tpu.dot_dimension_numbers<[2], [2], [1], [1], [0, 0, 0, 1, 1, 1], [0], [0]>} : vector<2x32x128xf32>, vector<2x128x128xf32>, vector<2x32x128xf32> -> vector<2x32x128xf32>
    %c0_13 = arith.constant 0 : index
    %c0_14 = arith.constant 0 : index
    %c0_15 = arith.constant 0 : index
    %18 = vector.load %arg4[%c0_13, %c0_14, %c0_15] : memref<2x32x128xf32, #tpu.memory_space<vmem>>, vector<2x32x128xf32>
    tpu.vector_store %arg4[%c0_13, %c0_14, %c0_15], %17 {strides = array<i32>} : memref<2x32x128xf32, #tpu.memory_space<vmem>>, vector<2x32x128xf32>,
    return
  }
  func.func @transform_0(%arg0: i32) -> (i32, i32, i32) {
    %c0_i32 = arith.constant 0 : i32
    %c0_i32_0 = arith.constant 0 : i32
    %c0_i32_1 = arith.constant 0 : i32
    return %arg0, %c0_i32, %c0_i32_0 : i32, i32, i32
  }
  func.func @transform_1(%arg0: i32) -> (i32, i32, i32) {
    %c0_i32 = arith.constant 0 : i32
    %c0_i32_0 = arith.constant 0 : i32
    %c0_i32_1 = arith.constant 0 : i32
    return %arg0, %c0_i32, %c0_i32_0 : i32, i32, i32
  }
  func.func @transform_2(%arg0: i32) -> (i32, i32, i32) {
    %c0_i32 = arith.constant 0 : i32
    %c0_i32_0 = arith.constant 0 : i32
    %c0_i32_1 = arith.constant 0 : i32
    return %arg0, %c0_i32, %c0_i32_0 : i32, i32, i32
  }
  func.func @transform_3(%arg0: i32) -> (i32, i32, i32) {
    %c0_i32 = arith.constant 0 : i32
    %c0_i32_0 = arith.constant 0 : i32
    %c0_i32_1 = arith.constant 0 : i32
    return %arg0, %c0_i32, %c0_i32_0 : i32, i32, i32
  }
}

</mosaic_0001>

<llo_original>
// kernel: tpu_custom_call.1
$region0: #{tpu_custom_call.1}
  #allocation0 [shape = 'u32[]', space=smem, size = 0x4, offset = 0x4, fixed_abs, tag = 'smem constant byte address 0x4 - core index']
  #allocation1 [shape = 'u32[144,128]{1,0:T(1,128)}', space=vmem, size = 0x12000, scoped, tag = 'internal scratch']
  %s0 = inlined_call_operand.hbm [shape: f32[4,32,128], index: 0, kind: input, shape index: {}]
  %s1 = inlined_call_operand.hbm [shape: f32[4,32,128], index: 1, kind: input, shape index: {}]
  %s2 = inlined_call_operand.hbm [shape: f32[4,32,128], index: 2, kind: input, shape index: {}]
  %s3 = inlined_call_operand.hbm [shape: f32[4,32,128], index: 3, kind: output, shape index: {}]
  %s4 = sld [smem:[#allocation0]]
  $region57: #{tpu_custom_call.1} parent=0
    _
  %s6 = ssub.s32 1, %s4
  %s7 = scalar_select 0, %s6, %s4
  $region1: #{tpu_custom_call.1} parent=0
    #allocation2 [shape = 'u8[65536]{0}', space=vmem, size = 0x10000, scoped, tag = 'input window, operand 0']
    #allocation3 [shape = 's32[2]{0}', space=sflag, size = 0x8, scoped, tag = 'scoped memory for tpu_custom_call.1']
    #allocation4 [shape = 's32[2]{0}', space=sflag, size = 0x8, scoped, tag = 'scoped memory for tpu_custom_call.1']
    #allocation5 [shape = 'u8[65536]{0}', space=vmem, size = 0x10000, scoped, tag = 'input window, operand 1']
    #allocation6 [shape = 's32[2]{0}', space=sflag, size = 0x8, scoped, tag = 'scoped memory for tpu_custom_call.1']
    #allocation7 [shape = 'u8[65536]{0}', space=vmem, size = 0x10000, scoped, tag = 'input window, operand 2']
    #allocation8 [shape = 'u8[65536]{0}', space=vmem, size = 0x10000, scoped, tag = 'output window, operand 0']
    %8 = vsyncpa [#allocation3], 0
    %s9 = scalar_lea.sflag [#allocation3], 1
    %10 = vsyncpa %s9, 0
    %11 = vsyncpa [#allocation6], 0
    %s12 = scalar_lea.sflag [#allocation6], 1
    %13 = vsyncpa %s12, 0
    %14 = vsyncpa [#allocation4], 0
    %s15 = scalar_lea.sflag [#allocation4], 1
    %16 = vsyncpa %s15, 0
    loop: start=0, step=1, limit=4
    $region2: #{tpu_custom_call.1} parent=1 // loop_pre_header
      _
    $region3: #{tpu_custom_call.1} parent=1 // loop_header
      %s18 = sphi 0, %s22
      %p19 = scmp.ge.s32.totalorder %s18, 4
      %s28 = sphi 0, %s30
      %s31 = sphi 0, %s28
      %s32 = sphi 0, %s31
      %s48 = sphi 0, %s32
      %s54 = sphi 0, %s56
      %s57 = sphi 0, %s54
      %s58 = sphi 0, %s57
      %s74 = sphi 0, %s58
      %s80 = sphi 0, %s82
      %s83 = sphi 0, %s80
      %s84 = sphi 0, %s83
      %s100 = sphi 0, %s84
      %s106 = sphi 0, %s108
      %s109 = sphi 0, %s106
      %s110 = sphi 0, %s109
      %s126 = sphi 0, %s110
    $region4: #{tpu_custom_call.1} parent=1 // loop_header_branch
      %21 = sbr.rel (%p19) target = $region8
    $region5: #{tpu_custom_call.1} parent=1 // loop_body
      %s23 = ssub.s32 %s18, 1
      %s24 = ssub.s32 %s18, 2
      %s25 = sadd.s32 %s18, 1
      %s26 = ssub.s32 %s18, %s25
      %p27 = scmp.eq.s32.totalorder %s26, 0
      %s29 = sadd.s32 %s28, 1
      %s30 = scalar_select %p27, %s28, %s29
      %p33 = pneg %p27
      %p34 = scmp.eq.s32.totalorder %s18, 1
      %p35 = por %p33, %p34
      %p36 = scmp.ne.s32.totalorder %s28, %s31
      %p37 = scmp.eq.s32.totalorder %s18, 0
      %p38 = por %p36, %p37
      %p39 = scmp.ne.s32.totalorder %s28, %s31
      %p40 = scmp.eq.s32.totalorder %s23, 1
      %p41 = por %p39, %p40
      %p42 = scmp.ne.s32.totalorder %s31, %s32
      %p43 = scmp.eq.s32.totalorder %s23, 0
      %p44 = por %p42, %p43
      %p45 = scmp.ne.s32.totalorder %s31, %s32
      %p46 = scmp.eq.s32.totalorder %s24, 1
      %p47 = por %p45, %p46
      %p49 = scmp.ne.s32.totalorder %s32, %s48
      %p50 = scmp.eq.s32.totalorder %s24, 0
      %p51 = por %p49, %p50
      %s52 = ssub.s32 %s18, %s25
      %p53 = scmp.eq.s32.totalorder %s52, 0
      %s55 = sadd.s32 %s54, 1
      %s56 = scalar_select %p53, %s54, %s55
      %p59 = pneg %p53
      %p60 = scmp.eq.s32.totalorder %s18, 1
      %p61 = por %p59, %p60
      %p62 = scmp.ne.s32.totalorder %s54, %s57
      %p63 = scmp.eq.s32.totalorder %s18, 0
      %p64 = por %p62, %p63
      %p65 = scmp.ne.s32.totalorder %s54, %s57
      %p66 = scmp.eq.s32.totalorder %s23, 1
      %p67 = por %p65, %p66
      %p68 = scmp.ne.s32.totalorder %s57, %s58
      %p69 = scmp.eq.s32.totalorder %s23, 0
      %p70 = por %p68, %p69
      %p71 = scmp.ne.s32.totalorder %s57, %s58
      %p72 = scmp.eq.s32.totalorder %s24, 1
      %p73 = por %p71, %p72
      %p75 = scmp.ne.s32.totalorder %s58, %s74
      %p76 = scmp.eq.s32.totalorder %s24, 0
      %p77 = por %p75, %p76
      %s78 = ssub.s32 %s18, %s25
      %p79 = scmp.eq.s32.totalorder %s78, 0
      %s81 = sadd.s32 %s80, 1
      %s82 = scalar_select %p79, %s80, %s81
      %p85 = pneg %p79
      %p86 = scmp.eq.s32.totalorder %s18, 1
      %p87 = por %p85, %p86
      %p88 = scmp.ne.s32.totalorder %s80, %s83
      %p89 = scmp.eq.s32.totalorder %s18, 0
      %p90 = por %p88, %p89
      %p91 = scmp.ne.s32.totalorder %s80, %s83
      %p92 = scmp.eq.s32.totalorder %s23, 1
      %p93 = por %p91, %p92
      %p94 = scmp.ne.s32.totalorder %s83, %s84
      %p95 = scmp.eq.s32.totalorder %s23, 0
      %p96 = por %p94, %p95
      %p97 = scmp.ne.s32.totalorder %s83, %s84
      %p98 = scmp.eq.s32.totalorder %s24, 1
      %p99 = por %p97, %p98
      %p101 = scmp.ne.s32.totalorder %s84, %s100
      %p102 = scmp.eq.s32.totalorder %s24, 0
      %p103 = por %p101, %p102
      %s104 = ssub.s32 %s18, %s25
      %p105 = scmp.eq.s32.totalorder %s104, 0
      %s107 = sadd.s32 %s106, 1
      %s108 = scalar_select %p105, %s106, %s107
      %p111 = pneg %p105
      %p112 = scmp.eq.s32.totalorder %s18, 1
      %p113 = por %p111, %p112
      %p114 = scmp.ne.s32.totalorder %s106, %s109
      %p115 = scmp.eq.s32.totalorder %s18, 0
      %p116 = por %p114, %p115
      %p117 = scmp.ne.s32.totalorder %s106, %s109
      %p118 = scmp.eq.s32.totalorder %s23, 1
      %p119 = por %p117, %p118
      %p120 = scmp.ne.s32.totalorder %s109, %s110
      %p121 = scmp.eq.s32.totalorder %s23, 0
      %p122 = por %p120, %p121
      %p123 = scmp.ne.s32.totalorder %s109, %s110
      %p124 = scmp.eq.s32.totalorder %s24, 1
      %p125 = por %p123, %p124
      %p127 = scmp.ne.s32.totalorder %s110, %s126
      %p128 = scmp.eq.s32.totalorder %s24, 0
      %p129 = por %p127, %p128
      %p130 = scmp.le.s32.totalorder 1, %s18
      %p131 = scmp.lt.s32.totalorder %s18, 3
      %p132 = pnand %p130, %p131
      %p133 = pneg %p132
      // Predicated region
      $region9: #{tpu_custom_call.1} parent=5 // pred_check
        _
      $region10: #{tpu_custom_call.1} parent=5 // pred_check_branch
        %135 = sbr.rel (%p132) target = $region12
      $region11: #{tpu_custom_call.1} parent=5 // pred_region
        %s136 = ssub.s32 %s18, 1
      $region12: #{tpu_custom_call.1} parent=5 // pred_fallthru
        _
      %p137 = scmp.lt.s32.totalorder %s18, 2
      // Predicated region
      $region13: #{tpu_custom_call.1} parent=5 // pred_check
        %p138 = pneg %p137
      $region14: #{tpu_custom_call.1} parent=5 // pred_check_branch
        %140 = sbr.rel (%p138) target = $region16
      $region15: #{tpu_custom_call.1} parent=5 // pred_region
        // Predicated region
        $region17: #{tpu_custom_call.1} parent=15 // pred_check
          %p141 = pneg %p38
        $region18: #{tpu_custom_call.1} parent=15 // pred_check_branch
          %143 = sbr.rel (%p141) target = $region20
        $region19: #{tpu_custom_call.1} parent=15 // pred_region
          %s144 = sand.u32 %s28, 1
          %s145 = scalar_lea.sflag [#allocation3], %s144
          %s146 = sand.u32 %s28, 1
          %s147 = smul.addr %s146, 64
          %s148 = scalar_lea.vmem [#allocation2], %s147
          %s149 = smul.u32 2, %s18
          %s151 = ssub.s32 1024, 1024
          %152 = vsyncadd %s145, %s151
          %s153 = smul.addr %s149, 4
          %s154 = smul.addr %s153, 128
          %s155 = scalar_lea.hbm %s0, %s154
          %s156 = sshll.u32 %s148, 4
          %s157 = int_to_ptr.vmem [resolvable:$true] %s156
          %162 = dma.hbm_to_vmem [thread:$0]  %s155, 1024, %s157, %s145, 128, 128, 8
        $region20: #{tpu_custom_call.1} parent=15 // pred_fallthru
          _
        // Predicated region
        $region21: #{tpu_custom_call.1} parent=15 // pred_check
          %p163 = pneg %p64
        $region22: #{tpu_custom_call.1} parent=15 // pred_check_branch
          %165 = sbr.rel (%p163) target = $region24
        $region23: #{tpu_custom_call.1} parent=15 // pred_region
          %s166 = sand.u32 %s18, 1
          %s167 = scalar_lea.sflag [#allocation6], %s166
          %s168 = sand.u32 %s54, 1
          %s169 = smul.addr %s168, 64
          %s170 = scalar_lea.vmem [#allocation5], %s169
          %s171 = smul.u32 2, %s18
          %s173 = ssub.s32 1024, 1024
          %174 = vsyncadd %s167, %s173
          %s175 = smul.addr %s171, 4
          %s176 = smul.addr %s175, 128
          %s177 = scalar_lea.hbm %s1, %s176
          %s178 = sshll.u32 %s170, 4
          %s179 = int_to_ptr.vmem [resolvable:$true] %s178
          %184 = dma.hbm_to_vmem [thread:$0]  %s177, 1024, %s179, %s167, 128, 128, 8
        $region24: #{tpu_custom_call.1} parent=15 // pred_fallthru
          _
        // Predicated region
        $region25: #{tpu_custom_call.1} parent=15 // pred_check
          %p185 = pneg %p90
        $region26: #{tpu_custom_call.1} parent=15 // pred_check_branch
          %187 = sbr.rel (%p185) target = $region28
        $region27: #{tpu_custom_call.1} parent=15 // pred_region
          %s188 = sand.u32 %s18, 1
          %s189 = scalar_lea.sflag [#allocation6], %s188
          %s190 = sand.u32 %s80, 1
          %s191 = smul.addr %s190, 64
          %s192 = scalar_lea.vmem [#allocation7], %s191
          %s193 = smul.u32 2, %s18
          %s195 = ssub.s32 1024, 1024
          %196 = vsyncadd %s189, %s195
          %s197 = smul.addr %s193, 4
          %s198 = smul.addr %s197, 128
          %s199 = scalar_lea.hbm %s2, %s198
          %s200 = sshll.u32 %s192, 4
          %s201 = int_to_ptr.vmem [resolvable:$true] %s200
          %206 = dma.hbm_to_vmem [thread:$0]  %s199, 1024, %s201, %s189, 128, 128, 8
        $region28: #{tpu_custom_call.1} parent=15 // pred_fallthru
          _
      $region16: #{tpu_custom_call.1} parent=5 // pred_fallthru
        _
      %p207 = scmp.le.s32.totalorder 1, %s18
      %p208 = scmp.lt.s32.totalorder %s18, 3
      %p209 = pnand %p207, %p208
      %p210 = pneg %p209
      // Predicated region
      $region29: #{tpu_custom_call.1} parent=5 // pred_check
        _
      $region30: #{tpu_custom_call.1} parent=5 // pred_check_branch
        %212 = sbr.rel (%p209) target = $region32
      $region31: #{tpu_custom_call.1} parent=5 // pred_region
        %s213 = ssub.s32 %s18, 1
        %s214 = sand.u32 %s31, 1
        %s215 = scalar_lea.sflag [#allocation3], %s214
        %s216 = sand.u32 %s31, 1
        %s217 = smul.addr %s216, 64
        %s218 = scalar_lea.vmem [#allocation2], %s217
        // Predicated region
        $region33: #{tpu_custom_call.1} parent=31 // pred_check
          %p219 = pneg %p44
        $region34: #{tpu_custom_call.1} parent=31 // pred_check_branch
          %221 = sbr.rel (%p219) target = $region36
        $region35: #{tpu_custom_call.1} parent=31 // pred_region
          %222 = dma.done %s215, 1024
        $region36: #{tpu_custom_call.1} parent=31 // pred_fallthru
          _
        %s223 = sand.u32 %s23, 1
        %s224 = scalar_lea.sflag [#allocation6], %s223
        %s225 = sand.u32 %s57, 1
        %s226 = smul.addr %s225, 64
        %s227 = scalar_lea.vmem [#allocation5], %s226
        // Predicated region
        $region37: #{tpu_custom_call.1} parent=31 // pred_check
          %p228 = pneg %p70
        $region38: #{tpu_custom_call.1} parent=31 // pred_check_branch
          %230 = sbr.rel (%p228) target = $region40
        $region39: #{tpu_custom_call.1} parent=31 // pred_region
          %231 = dma.done %s224, 1024
        $region40: #{tpu_custom_call.1} parent=31 // pred_fallthru
          _
        %s232 = sand.u32 %s23, 1
        %s233 = scalar_lea.sflag [#allocation6], %s232
        %s234 = sand.u32 %s83, 1
        %s235 = smul.addr %s234, 64
        %s236 = scalar_lea.vmem [#allocation7], %s235
        // Predicated region
        $region41: #{tpu_custom_call.1} parent=31 // pred_check
          %p237 = pneg %p96
        $region42: #{tpu_custom_call.1} parent=31 // pred_check_branch
          %239 = sbr.rel (%p237) target = $region44
        $region43: #{tpu_custom_call.1} parent=31 // pred_region
          %240 = dma.done %s233, 1024
        $region44: #{tpu_custom_call.1} parent=31 // pred_fallthru
          _
        %s241 = sand.u32 %s31, 1
        %s242 = scalar_lea.sflag [#allocation3], %s241
        %s243 = sand.u32 %s31, 1
        %s244 = smul.addr %s243, 64
        %s245 = scalar_lea.vmem [#allocation2], %s244
        %p246 = pneg %p44
        %p247 = pneg %p41
        %s248 = sand.u32 %s23, 1
        %s249 = scalar_lea.sflag [#allocation6], %s248
        %s250 = sand.u32 %s57, 1
        %s251 = smul.addr %s250, 64
        %s252 = scalar_lea.vmem [#allocation5], %s251
        %p253 = pneg %p70
        %p254 = pneg %p67
        %s255 = sand.u32 %s23, 1
        %s256 = scalar_lea.sflag [#allocation6], %s255
        %s257 = sand.u32 %s83, 1
        %s258 = smul.addr %s257, 64
        %s259 = scalar_lea.vmem [#allocation7], %s258
        %p260 = pneg %p96
        %p261 = pneg %p93
        %p262 = pneg %p122
        %p263 = pneg %p119
        %s264 = sand.u32 %s109, 1
        %s265 = scalar_lea.sflag [#allocation4], %s264
        %s266 = sand.u32 %s109, 1
        %s267 = smul.addr %s266, 64
        %s268 = scalar_lea.vmem [#allocation8], %s267
        %s269 = smul.u32 2, %s23
        %s270 = smul.u32 2, %s23
        %s271 = smul.u32 2, %s23
        %s272 = smul.u32 2, %s23
        %v273 = vld [vmem:[%s218] sm:$0xff]
        %v274 = vld [vmem:[%s218 + $0x8] sm:$0xff]
        %v275 = vld [vmem:[%s218 + $0x10] sm:$0xff]
        %v276 = vld [vmem:[%s218 + $0x18] sm:$0xff]
        %v277 = vld [vmem:[%s218 + $0x20] sm:$0xff]
        %v278 = vld [vmem:[%s218 + $0x28] sm:$0xff]
        %v279 = vld [vmem:[%s218 + $0x30] sm:$0xff]
        %v280 = vld [vmem:[%s218 + $0x38] sm:$0xff]
        %v281 = vmul.f32 %v273, 0.4204482
        %v282 = vmul.f32 %v274, 0.4204482
        %v283 = vmul.f32 %v275, 0.4204482
        %v284 = vmul.f32 %v276, 0.4204482
        %v285 = vmul.f32 %v277, 0.4204482
        %v286 = vmul.f32 %v278, 0.4204482
        %v287 = vmul.f32 %v279, 0.4204482
        %v288 = vmul.f32 %v280, 0.4204482
        %v289 = vld [vmem:[%s227] sm:$0xff]
        %v290 = vld [vmem:[%s227 + $0x8] sm:$0xff]
        %v291 = vld [vmem:[%s227 + $0x10] sm:$0xff]
        %v292 = vld [vmem:[%s227 + $0x18] sm:$0xff]
        %v293 = vld [vmem:[%s227 + $0x20] sm:$0xff]
        %v294 = vld [vmem:[%s227 + $0x28] sm:$0xff]
        %v295 = vld [vmem:[%s227 + $0x30] sm:$0xff]
        %v296 = vld [vmem:[%s227 + $0x38] sm:$0xff]
        %v297 = vmul.f32 %v289, 0.4204482
        %v298 = vmul.f32 %v290, 0.4204482
        %v299 = vmul.f32 %v291, 0.4204482
        %v300 = vmul.f32 %v292, 0.4204482
        %v301 = vmul.f32 %v293, 0.4204482
        %v302 = vmul.f32 %v294, 0.4204482
        %v303 = vmul.f32 %v295, 0.4204482
        %v304 = vmul.f32 %v296, 0.4204482
        %305 = vxpose.xlu0.b32.start [1/16] %v281, 128
        %306 = vxpose.xlu0.b32.cont [2/16] %v282, 128
        %307 = vxpose.xlu0.b32.cont [3/16] %v283, 128
        %308 = vxpose.xlu0.b32.cont [4/16] %v284, 128
        %309 = vxpose.xlu0.b32.cont [5/16] 0.0, 128
        %310 = vxpose.xlu0.b32.cont [6/16] 0.0, 128
        %311 = vxpose.xlu0.b32.cont [7/16] 0.0, 128
        %312 = vxpose.xlu0.b32.cont [8/16] 0.0, 128
        %313 = vxpose.xlu0.b32.cont [9/16] 0.0, 128
        %314 = vxpose.xlu0.b32.cont [10/16] 0.0, 128
        %315 = vxpose.xlu0.b32.cont [11/16] 0.0, 128
        %316 = vxpose.xlu0.b32.cont [12/16] 0.0, 128
        %317 = vxpose.xlu0.b32.cont [13/16] 0.0, 128
        %318 = vxpose.xlu0.b32.cont [14/16] 0.0, 128
        %319 = vxpose.xlu0.b32.cont [15/16] 0.0, 128
        %320 = vxpose.xlu0.b32.end [16/16] 0.0, 128
        %v321 = vpop.trf.xlu0
        %v322 = vpop.trf.xlu0
        %v323 = vpop.trf.xlu0
        %v324 = vpop.trf.xlu0
        %v325 = vpop.trf.xlu0
        %v326 = vpop.trf.xlu0
        %v327 = vpop.trf.xlu0
        %v328 = vpop.trf.xlu0
        %v329 = vpop.trf.xlu0
        %v330 = vpop.trf.xlu0
        %v331 = vpop.trf.xlu0
        %v332 = vpop.trf.xlu0
        %v333 = vpop.trf.xlu0
        %v334 = vpop.trf.xlu0
        %v335 = vpop.trf.xlu0
        %v336 = vpop.trf.xlu0
        %vm337 = vcmask 261120
        %v339 = vsel %vm337, %v321, 0
        %v342 = vsel %vm337, %v322, 0
        %v345 = vsel %vm337, %v323, 0
        %v348 = vsel %vm337, %v324, 0
        %v351 = vsel %vm337, %v325, 0
        %v354 = vsel %vm337, %v326, 0
        %v357 = vsel %vm337, %v327, 0
        %v360 = vsel %vm337, %v328, 0
        %v363 = vsel %vm337, %v329, 0
        %v366 = vsel %vm337, %v330, 0
        %v369 = vsel %vm337, %v331, 0
        %v372 = vsel %vm337, %v332, 0
        %v375 = vsel %vm337, %v333, 0
        %v378 = vsel %vm337, %v334, 0
        %v381 = vsel %vm337, %v335, 0
        %v384 = vsel %vm337, %v336, 0
        %386 = vmatprep.subr.mxu0 0.0
        %387 = vmatpush1.msra.mxu0 %v297
        %388 = vmatprep.subr.mxu0 0.0
        %389 = vmatpush1.msra.mxu0 %v298
        %390 = vmatprep.subr.mxu0 0.0
        %391 = vmatpush1.msra.mxu0 %v299
        %392 = vmatprep.subr.mxu0 0.0
        %393 = vmatpush1.msra.mxu0 %v300
        %394 = vmatprep.subr.mxu0 0.0
        %395 = vmatpush1.msra.mxu0 0.0
        %396 = vmatprep.subr.mxu0 0.0
        %397 = vmatpush1.msra.mxu0 0.0
        %398 = vmatprep.subr.mxu0 0.0
        %399 = vmatpush1.msra.mxu0 0.0
        %400 = vmatprep.subr.mxu0 0.0
        %401 = vmatpush1.msra.mxu0 0.0
        %402 = vmatprep.subr.mxu0 0.0
        %403 = vmatpush1.msra.mxu0 0.0
        %404 = vmatprep.subr.mxu0 0.0
        %405 = vmatpush1.msra.mxu0 0.0
        %406 = vmatprep.subr.mxu0 0.0
        %407 = vmatpush1.msra.mxu0 0.0
        %408 = vmatprep.subr.mxu0 0.0
        %409 = vmatpush1.msra.mxu0 0.0
        %410 = vmatprep.subr.mxu0 0.0
        %411 = vmatpush1.msra.mxu0 0.0
        %412 = vmatprep.subr.mxu0 0.0
        %413 = vmatpush1.msra.mxu0 0.0
        %414 = vmatprep.subr.mxu0 0.0
        %415 = vmatpush1.msra.mxu0 0.0
        %416 = vmatprep.subr.mxu0 0.0
        %417 = vmatpush1.msra.mxu0 0.0
        %418 = vmatprep.subr.mxu0 0.0
        %419 = vmatpush1.msra.mxu0 0.0
        %420 = vmatprep.subr.mxu0 0.0
        %421 = vmatpush1.msra.mxu0 0.0
        %422 = vmatprep.subr.mxu0 0.0
        %423 = vmatpush1.msra.mxu0 0.0
        %424 = vmatprep.subr.mxu0 0.0
        %425 = vmatpush1.msra.mxu0 0.0
        %426 = vmatprep.subr.mxu0 0.0
        %427 = vmatpush1.msra.mxu0 0.0
        %428 = vmatprep.subr.mxu0 0.0
        %429 = vmatpush1.msra.mxu0 0.0
        %430 = vmatprep.subr.mxu0 0.0
        %431 = vmatpush1.msra.mxu0 0.0
        %432 = vmatprep.subr.mxu0 0.0
        %433 = vmatpush1.msra.mxu0 0.0
        %434 = vmatprep.subr.mxu0 0.0
        %435 = vmatpush1.msra.mxu0 0.0
        %436 = vmatprep.subr.mxu0 0.0
        %437 = vmatpush1.msra.mxu0 0.0
        %438 = vmatprep.subr.mxu0 0.0
        %439 = vmatpush1.msra.mxu0 0.0
        %440 = vmatprep.subr.mxu0 0.0
        %441 = vmatpush1.msra.mxu0 0.0
        %442 = vmatprep.subr.mxu0 0.0
        %443 = vmatpush1.msra.mxu0 0.0
        %444 = vmatprep.subr.mxu0 0.0
        %445 = vmatpush1.msra.mxu0 0.0
        %446 = vmatprep.subr.mxu0 0.0
        %447 = vmatpush1.msra.mxu0 0.0
        %448 = vmatprep.subr.mxu0 0.0
        %449 = vmatpush1.msra.mxu0 0.0
        %450 = vmatprep.mubr.f32.mxu0 0.0
        %451 = vmatmul.mubr.f32.gmra.mrb[0].mxu0 %v339
        %v452 = vpop.f32.mrb[0].mxu0
        %v453 = vadd.f32 0.0, %v452
        %v454 = vpop.f32.mrb[0].mxu0
        %455 = vmatprep.mubr.f32.mxu0 0.0
        %456 = vmatmul.mubr.f32.gmra.mrb[0].mxu0 %v342
        %v457 = vpop.f32.mrb[0].mxu0
        %v458 = vadd.f32 0.0, %v457
        %v459 = vpop.f32.mrb[0].mxu0
        %460 = vmatprep.mubr.f32.mxu0 0.0
        %461 = vmatmul.mubr.f32.gmra.mrb[0].mxu0 %v345
        %v462 = vpop.f32.mrb[0].mxu0
        %v463 = vadd.f32 0.0, %v462
        %v464 = vpop.f32.mrb[0].mxu0
        %465 = vmatprep.mubr.f32.mxu0 0.0
        %466 = vmatmul.mubr.f32.gmra.mrb[0].mxu0 %v348
        %v467 = vpop.f32.mrb[0].mxu0
        %v468 = vadd.f32 0.0, %v467
        %v469 = vpop.f32.mrb[0].mxu0
        %470 = vmatprep.mubr.f32.mxu0 0.0
        %471 = vmatmul.mubr.f32.gmra.mrb[0].mxu0 %v351
        %v472 = vpop.f32.mrb[0].mxu0
        %v473 = vadd.f32 0.0, %v472
        %v474 = vpop.f32.mrb[0].mxu0
        %475 = vmatprep.mubr.f32.mxu0 0.0
        %476 = vmatmul.mubr.f32.gmra.mrb[0].mxu0 %v354
        %v477 = vpop.f32.mrb[0].mxu0
        %v478 = vadd.f32 0.0, %v477
        %v479 = vpop.f32.mrb[0].mxu0
        %480 = vmatprep.mubr.f32.mxu0 0.0
        %481 = vmatmul.mubr.f32.gmra.mrb[0].mxu0 %v357
        %v482 = vpop.f32.mrb[0].mxu0
        %v483 = vadd.f32 0.0, %v482
        %v484 = vpop.f32.mrb[0].mxu0
        %485 = vmatprep.mubr.f32.mxu0 0.0
        %486 = vmatmul.mubr.f32.gmra.mrb[0].mxu0 %v360
        %v487 = vpop.f32.mrb[0].mxu0
        %v488 = vadd.f32 0.0, %v487
        %v489 = vpop.f32.mrb[0].mxu0
        %490 = vmatprep.mubr.f32.mxu0 0.0
        %491 = vmatmul.mubr.f32.gmra.mrb[0].mxu0 %v363
        %v492 = vpop.f32.mrb[0].mxu0
        %v493 = vadd.f32 0.0, %v492
        %v494 = vpop.f32.mrb[0].mxu0
        %495 = vmatprep.mubr.f32.mxu0 0.0
        %496 = vmatmul.mubr.f32.gmra.mrb[0].mxu0 %v366
        %v497 = vpop.f32.mrb[0].mxu0
        %v498 = vadd.f32 0.0, %v497
        %v499 = vpop.f32.mrb[0].mxu0
        %500 = vmatprep.mubr.f32.mxu0 0.0
        %501 = vmatmul.mubr.f32.gmra.mrb[0].mxu0 %v369
        %v502 = vpop.f32.mrb[0].mxu0
        %v503 = vadd.f32 0.0, %v502
        %v504 = vpop.f32.mrb[0].mxu0
        %505 = vmatprep.mubr.f32.mxu0 0.0
        %506 = vmatmul.mubr.f32.gmra.mrb[0].mxu0 %v372
        %v507 = vpop.f32.mrb[0].mxu0
        %v508 = vadd.f32 0.0, %v507
        %v509 = vpop.f32.mrb[0].mxu0
        %510 = vmatprep.mubr.f32.mxu0 0.0
        %511 = vmatmul.mubr.f32.gmra.mrb[0].mxu0 %v375
        %v512 = vpop.f32.mrb[0].mxu0
        %v513 = vadd.f32 0.0, %v512
        %v514 = vpop.f32.mrb[0].mxu0
        %515 = vmatprep.mubr.f32.mxu0 0.0
        %516 = vmatmul.mubr.f32.gmra.mrb[0].mxu0 %v378
        %v517 = vpop.f32.mrb[0].mxu0
        %v518 = vadd.f32 0.0, %v517
        %v519 = vpop.f32.mrb[0].mxu0
        %520 = vmatprep.mubr.f32.mxu0 0.0
        %521 = vmatmul.mubr.f32.gmra.mrb[0].mxu0 %v381
        %v522 = vpop.f32.mrb[0].mxu0
        %v523 = vadd.f32 0.0, %v522
        %v524 = vpop.f32.mrb[0].mxu0
        %525 = vmatprep.mubr.f32.mxu0 0.0
        %526 = vmatmul.mubr.f32.gmra.mrb[0].mxu0 %v384
        %v527 = vpop.f32.mrb[0].mxu0
        %v528 = vadd.f32 0.0, %v527
        %v529 = vpop.f32.mrb[0].mxu0
        %530 = vdwg.mxu0
        %531 = vxpose.xlu0.b32.start [1/16] %v285, 128
        %532 = vxpose.xlu0.b32.cont [2/16] %v286, 128
        %533 = vxpose.xlu0.b32.cont [3/16] %v287, 128
        %534 = vxpose.xlu0.b32.cont [4/16] %v288, 128
        %535 = vxpose.xlu0.b32.cont [5/16] 0.0, 128
        %536 = vxpose.xlu0.b32.cont [6/16] 0.0, 128
        %537 = vxpose.xlu0.b32.cont [7/16] 0.0, 128
        %538 = vxpose.xlu0.b32.cont [8/16] 0.0, 128
        %539 = vxpose.xlu0.b32.cont [9/16] 0.0, 128
        %540 = vxpose.xlu0.b32.cont [10/16] 0.0, 128
        %541 = vxpose.xlu0.b32.cont [11/16] 0.0, 128
        %542 = vxpose.xlu0.b32.cont [12/16] 0.0, 128
        %543 = vxpose.xlu0.b32.cont [13/16] 0.0, 128
        %544 = vxpose.xlu0.b32.cont [14/16] 0.0, 128
        %545 = vxpose.xlu0.b32.cont [15/16] 0.0, 128
        %546 = vxpose.xlu0.b32.end [16/16] 0.0, 128
        %v547 = vpop.trf.xlu0
        %v548 = vpop.trf.xlu0
        %v549 = vpop.trf.xlu0
        %v550 = vpop.trf.xlu0
        %v551 = vpop.trf.xlu0
        %v552 = vpop.trf.xlu0
        %v553 = vpop.trf.xlu0
        %v554 = vpop.trf.xlu0
        %v555 = vpop.trf.xlu0
        %v556 = vpop.trf.xlu0
        %v557 = vpop.trf.xlu0
        %v558 = vpop.trf.xlu0
        %v559 = vpop.trf.xlu0
        %v560 = vpop.trf.xlu0
        %v561 = vpop.trf.xlu0
        %v562 = vpop.trf.xlu0
        %v564 = vsel %vm337, %v547, 0
        %v567 = vsel %vm337, %v548, 0
        %v570 = vsel %vm337, %v549, 0
        %v573 = vsel %vm337, %v550, 0
        %v576 = vsel %vm337, %v551, 0
        %v579 = vsel %vm337, %v552, 0
        %v582 = vsel %vm337, %v553, 0
        %v585 = vsel %vm337, %v554, 0
        %v588 = vsel %vm337, %v555, 0
        %v591 = vsel %vm337, %v556, 0
        %v594 = vsel %vm337, %v557, 0
        %v597 = vsel %vm337, %v558, 0
        %v600 = vsel %vm337, %v559, 0
        %v603 = vsel %vm337, %v560, 0
        %v606 = vsel %vm337, %v561, 0
        %v609 = vsel %vm337, %v562, 0
        %611 = vmatprep.subr.mxu0 0.0
        %612 = vmatpush1.msra.mxu0 %v301
        %613 = vmatprep.subr.mxu0 0.0
        %614 = vmatpush1.msra.mxu0 %v302
        %615 = vmatprep.subr.mxu0 0.0
        %616 = vmatpush1.msra.mxu0 %v303
        %617 = vmatprep.subr.mxu0 0.0
        %618 = vmatpush1.msra.mxu0 %v304
        %619 = vmatprep.subr.mxu0 0.0
        %620 = vmatpush1.msra.mxu0 0.0
        %621 = vmatprep.subr.mxu0 0.0
        %622 = vmatpush1.msra.mxu0 0.0
        %623 = vmatprep.subr.mxu0 0.0
        %624 = vmatpush1.msra.mxu0 0.0
        %625 = vmatprep.subr.mxu0 0.0
        %626 = vmatpush1.msra.mxu0 0.0
        %627 = vmatprep.subr.mxu0 0.0
        %628 = vmatpush1.msra.mxu0 0.0
        %629 = vmatprep.subr.mxu0 0.0
        %630 = vmatpush1.msra.mxu0 0.0
        %631 = vmatprep.subr.mxu0 0.0
        %632 = vmatpush1.msra.mxu0 0.0
        %633 = vmatprep.subr.mxu0 0.0
        %634 = vmatpush1.msra.mxu0 0.0
        %635 = vmatprep.subr.mxu0 0.0
        %636 = vmatpush1.msra.mxu0 0.0
        %637 = vmatprep.subr.mxu0 0.0
        %638 = vmatpush1.msra.mxu0 0.0
        %639 = vmatprep.subr.mxu0 0.0
        %640 = vmatpush1.msra.mxu0 0.0
        %641 = vmatprep.subr.mxu0 0.0
        %642 = vmatpush1.msra.mxu0 0.0
        %643 = vmatprep.subr.mxu0 0.0
        %644 = vmatpush1.msra.mxu0 0.0
        %645 = vmatprep.subr.mxu0 0.0
        %646 = vmatpush1.msra.mxu0 0.0
        %647 = vmatprep.subr.mxu0 0.0
        %648 = vmatpush1.msra.mxu0 0.0
        %649 = vmatprep.subr.mxu0 0.0
        %650 = vmatpush1.msra.mxu0 0.0
        %651 = vmatprep.subr.mxu0 0.0
        %652 = vmatpush1.msra.mxu0 0.0
        %653 = vmatprep.subr.mxu0 0.0
        %654 = vmatpush1.msra.mxu0 0.0
        %655 = vmatprep.subr.mxu0 0.0
        %656 = vmatpush1.msra.mxu0 0.0
        %657 = vmatprep.subr.mxu0 0.0
        %658 = vmatpush1.msra.mxu0 0.0
        %659 = vmatprep.subr.mxu0 0.0
        %660 = vmatpush1.msra.mxu0 0.0
        %661 = vmatprep.subr.mxu0 0.0
        %662 = vmatpush1.msra.mxu0 0.0
        %663 = vmatprep.subr.mxu0 0.0
        %664 = vmatpush1.msra.mxu0 0.0
        %665 = vmatprep.subr.mxu0 0.0
        %666 = vmatpush1.msra.mxu0 0.0
        %667 = vmatprep.subr.mxu0 0.0
        %668 = vmatpush1.msra.mxu0 0.0
        %669 = vmatprep.subr.mxu0 0.0
        %670 = vmatpush1.msra.mxu0 0.0
        %671 = vmatprep.subr.mxu0 0.0
        %672 = vmatpush1.msra.mxu0 0.0
        %673 = vmatprep.subr.mxu0 0.0
        %674 = vmatpush1.msra.mxu0 0.0
        %675 = vmatprep.mubr.f32.mxu0 0.0
        %676 = vmatmul.mubr.f32.gmra.mrb[0].mxu0 %v564
        %v677 = vpop.f32.mrb[0].mxu0
        %v678 = vadd.f32 0.0, %v677
        %v679 = vpop.f32.mrb[0].mxu0
        %680 = vmatprep.mubr.f32.mxu0 0.0
        %681 = vmatmul.mubr.f32.gmra.mrb[0].mxu0 %v567
        %v682 = vpop.f32.mrb[0].mxu0
        %v683 = vadd.f32 0.0, %v682
        %v684 = vpop.f32.mrb[0].mxu0
        %685 = vmatprep.mubr.f32.mxu0 0.0
        %686 = vmatmul.mubr.f32.gmra.mrb[0].mxu0 %v570
        %v687 = vpop.f32.mrb[0].mxu0
        %v688 = vadd.f32 0.0, %v687
        %v689 = vpop.f32.mrb[0].mxu0
        %690 = vmatprep.mubr.f32.mxu0 0.0
        %691 = vmatmul.mubr.f32.gmra.mrb[0].mxu0 %v573
        %v692 = vpop.f32.mrb[0].mxu0
        %v693 = vadd.f32 0.0, %v692
        %v694 = vpop.f32.mrb[0].mxu0
        %695 = vmatprep.mubr.f32.mxu0 0.0
        %696 = vmatmul.mubr.f32.gmra.mrb[0].mxu0 %v576
        %v697 = vpop.f32.mrb[0].mxu0
        %v698 = vadd.f32 0.0, %v697
        %v699 = vpop.f32.mrb[0].mxu0
        %700 = vmatprep.mubr.f32.mxu0 0.0
        %701 = vmatmul.mubr.f32.gmra.mrb[0].mxu0 %v579
        %v702 = vpop.f32.mrb[0].mxu0
        %v703 = vadd.f32 0.0, %v702
        %v704 = vpop.f32.mrb[0].mxu0
        %705 = vmatprep.mubr.f32.mxu0 0.0
        %706 = vmatmul.mubr.f32.gmra.mrb[0].mxu0 %v582
        %v707 = vpop.f32.mrb[0].mxu0
        %v708 = vadd.f32 0.0, %v707
        %v709 = vpop.f32.mrb[0].mxu0
        %710 = vmatprep.mubr.f32.mxu0 0.0
        %711 = vmatmul.mubr.f32.gmra.mrb[0].mxu0 %v585
        %v712 = vpop.f32.mrb[0].mxu0
        %v713 = vadd.f32 0.0, %v712
        %v714 = vpop.f32.mrb[0].mxu0
        %715 = vmatprep.mubr.f32.mxu0 0.0
        %716 = vmatmul.mubr.f32.gmra.mrb[0].mxu0 %v588
        %v717 = vpop.f32.mrb[0].mxu0
        %v718 = vadd.f32 0.0, %v717
        %v719 = vpop.f32.mrb[0].mxu0
        %720 = vmatprep.mubr.f32.mxu0 0.0
        %721 = vmatmul.mubr.f32.gmra.mrb[0].mxu0 %v591
        %v722 = vpop.f32.mrb[0].mxu0
        %v723 = vadd.f32 0.0, %v722
        %v724 = vpop.f32.mrb[0].mxu0
        %725 = vmatprep.mubr.f32.mxu0 0.0
        %726 = vmatmul.mubr.f32.gmra.mrb[0].mxu0 %v594
        %v727 = vpop.f32.mrb[0].mxu0
        %v728 = vadd.f32 0.0, %v727
        %v729 = vpop.f32.mrb[0].mxu0
        %730 = vmatprep.mubr.f32.mxu0 0.0
        %731 = vmatmul.mubr.f32.gmra.mrb[0].mxu0 %v597
        %v732 = vpop.f32.mrb[0].mxu0
        %v733 = vadd.f32 0.0, %v732
        %v734 = vpop.f32.mrb[0].mxu0
        %735 = vmatprep.mubr.f32.mxu0 0.0
        %736 = vmatmul.mubr.f32.gmra.mrb[0].mxu0 %v600
        %v737 = vpop.f32.mrb[0].mxu0
        %v738 = vadd.f32 0.0, %v737
        %v739 = vpop.f32.mrb[0].mxu0
        %740 = vmatprep.mubr.f32.mxu0 0.0
        %741 = vmatmul.mubr.f32.gmra.mrb[0].mxu0 %v603
        %v742 = vpop.f32.mrb[0].mxu0
        %v743 = vadd.f32 0.0, %v742
        %v744 = vpop.f32.mrb[0].mxu0
        %745 = vmatprep.mubr.f32.mxu0 0.0
        %746 = vmatmul.mubr.f32.gmra.mrb[0].mxu0 %v606
        %v747 = vpop.f32.mrb[0].mxu0
        %v748 = vadd.f32 0.0, %v747
        %v749 = vpop.f32.mrb[0].mxu0
        %750 = vmatprep.mubr.f32.mxu0 0.0
        %751 = vmatmul.mubr.f32.gmra.mrb[0].mxu0 %v609
        %v752 = vpop.f32.mrb[0].mxu0
        %v753 = vadd.f32 0.0, %v752
        %v754 = vpop.f32.mrb[0].mxu0
        %755 = vdwg.mxu0
        %756 = vmax.xlane.f32.xlu0 %v453
        %v757 = vpop.xlane.xlu0 %756
        %758 = vmax.xlane.f32.xlu0 %v458
        %v759 = vpop.xlane.xlu0 %758
        %760 = vmax.xlane.f32.xlu0 %v463
        %v761 = vpop.xlane.xlu0 %760
        %762 = vmax.xlane.f32.xlu0 %v468
        %v763 = vpop.xlane.xlu0 %762
        %764 = vmax.xlane.f32.xlu0 %v473
        %v765 = vpop.xlane.xlu0 %764
        %766 = vmax.xlane.f32.xlu0 %v478
        %v767 = vpop.xlane.xlu0 %766
        %768 = vmax.xlane.f32.xlu0 %v483
        %v769 = vpop.xlane.xlu0 %768
        %770 = vmax.xlane.f32.xlu0 %v488
        %v771 = vpop.xlane.xlu0 %770
        %772 = vmax.xlane.f32.xlu0 %v493
        %v773 = vpop.xlane.xlu0 %772
        %774 = vmax.xlane.f32.xlu0 %v498
        %v775 = vpop.xlane.xlu0 %774
        %776 = vmax.xlane.f32.xlu0 %v503
        %v777 = vpop.xlane.xlu0 %776
        %778 = vmax.xlane.f32.xlu0 %v508
        %v779 = vpop.xlane.xlu0 %778
        %780 = vmax.xlane.f32.xlu0 %v513
        %v781 = vpop.xlane.xlu0 %780
        %782 = vmax.xlane.f32.xlu0 %v518
        %v783 = vpop.xlane.xlu0 %782
        %784 = vmax.xlane.f32.xlu0 %v523
        %v785 = vpop.xlane.xlu0 %784
        %786 = vmax.xlane.f32.xlu0 %v528
        %v787 = vpop.xlane.xlu0 %786
        %788 = vmax.xlane.f32.xlu0 %v678
        %v789 = vpop.xlane.xlu0 %788
        %790 = vmax.xlane.f32.xlu0 %v683
        %v791 = vpop.xlane.xlu0 %790
        %792 = vmax.xlane.f32.xlu0 %v688
        %v793 = vpop.xlane.xlu0 %792
        %794 = vmax.xlane.f32.xlu0 %v693
        %v795 = vpop.xlane.xlu0 %794
        %796 = vmax.xlane.f32.xlu0 %v698
        %v797 = vpop.xlane.xlu0 %796
        %798 = vmax.xlane.f32.xlu0 %v703
        %v799 = vpop.xlane.xlu0 %798
        %800 = vmax.xlane.f32.xlu0 %v708
        %v801 = vpop.xlane.xlu0 %800
        %802 = vmax.xlane.f32.xlu0 %v713
        %v803 = vpop.xlane.xlu0 %802
        %804 = vmax.xlane.f32.xlu0 %v718
        %v805 = vpop.xlane.xlu0 %804
        %806 = vmax.xlane.f32.xlu0 %v723
        %v807 = vpop.xlane.xlu0 %806
        %808 = vmax.xlane.f32.xlu0 %v728
        %v809 = vpop.xlane.xlu0 %808
        %810 = vmax.xlane.f32.xlu0 %v733
        %v811 = vpop.xlane.xlu0 %810
        %812 = vmax.xlane.f32.xlu0 %v738
        %v813 = vpop.xlane.xlu0 %812
        %814 = vmax.xlane.f32.xlu0 %v743
        %v815 = vpop.xlane.xlu0 %814
        %816 = vmax.xlane.f32.xlu0 %v748
        %v817 = vpop.xlane.xlu0 %816
        %818 = vmax.xlane.f32.xlu0 %v753
        %v819 = vpop.xlane.xlu0 %818
        %v820 = vsub.f32 %v453, %v757
        %v821 = vsub.f32 %v458, %v759
        %v822 = vsub.f32 %v463, %v761
        %v823 = vsub.f32 %v468, %v763
        %v824 = vsub.f32 %v473, %v765
        %v825 = vsub.f32 %v478, %v767
        %v826 = vsub.f32 %v483, %v769
        %v827 = vsub.f32 %v488, %v771
        %v828 = vsub.f32 %v493, %v773
        %v829 = vsub.f32 %v498, %v775
        %v830 = vsub.f32 %v503, %v777
        %v831 = vsub.f32 %v508, %v779
        %v832 = vsub.f32 %v513, %v781
        %v833 = vsub.f32 %v518, %v783
        %v834 = vsub.f32 %v523, %v785
        %v835 = vsub.f32 %v528, %v787
        %v836 = vsub.f32 %v678, %v789
        %v837 = vsub.f32 %v683, %v791
        %v838 = vsub.f32 %v688, %v793
        %v839 = vsub.f32 %v693, %v795
        %v840 = vsub.f32 %v698, %v797
        %v841 = vsub.f32 %v703, %v799
        %v842 = vsub.f32 %v708, %v801
        %v843 = vsub.f32 %v713, %v803
        %v844 = vsub.f32 %v718, %v805
        %v845 = vsub.f32 %v723, %v807
        %v846 = vsub.f32 %v728, %v809
        %v847 = vsub.f32 %v733, %v811
        %v848 = vsub.f32 %v738, %v813
        %v849 = vsub.f32 %v743, %v815
        %v850 = vsub.f32 %v748, %v817
        %v851 = vsub.f32 %v753, %v819
        %v852 = vmul.f32 %v820, 1.442695
        %v853 = vpow.pop %v852
        %v854 = vmul.f32 %v821, 1.442695
        %v855 = vpow.pop %v854
        %v856 = vmul.f32 %v822, 1.442695
        %v857 = vpow.pop %v856
        %v858 = vmul.f32 %v823, 1.442695
        %v859 = vpow.pop %v858
        %v860 = vmul.f32 %v824, 1.442695
        %v861 = vpow.pop %v860
        %v862 = vmul.f32 %v825, 1.442695
        %v863 = vpow.pop %v862
        %v864 = vmul.f32 %v826, 1.442695
        %v865 = vpow.pop %v864
        %v866 = vmul.f32 %v827, 1.442695
        %v867 = vpow.pop %v866
        %v868 = vmul.f32 %v828, 1.442695
        %v869 = vpow.pop %v868
        %v870 = vmul.f32 %v829, 1.442695
        %v871 = vpow.pop %v870
        %v872 = vmul.f32 %v830, 1.442695
        %v873 = vpow.pop %v872
        %v874 = vmul.f32 %v831, 1.442695
        %v875 = vpow.pop %v874
        %v876 = vmul.f32 %v832, 1.442695
        %v877 = vpow.pop %v876
        %v878 = vmul.f32 %v833, 1.442695
        %v879 = vpow.pop %v878
        %v880 = vmul.f32 %v834, 1.442695
        %v881 = vpow.pop %v880
        %v882 = vmul.f32 %v835, 1.442695
        %v883 = vpow.pop %v882
        %v884 = vmul.f32 %v836, 1.442695
        %v885 = vpow.pop %v884
        %v886 = vmul.f32 %v837, 1.442695
        %v887 = vpow.pop %v886
        %v888 = vmul.f32 %v838, 1.442695
        %v889 = vpow.pop %v888
        %v890 = vmul.f32 %v839, 1.442695
        %v891 = vpow.pop %v890
        %v892 = vmul.f32 %v840, 1.442695
        %v893 = vpow.pop %v892
        %v894 = vmul.f32 %v841, 1.442695
        %v895 = vpow.pop %v894
        %v896 = vmul.f32 %v842, 1.442695
        %v897 = vpow.pop %v896
        %v898 = vmul.f32 %v843, 1.442695
        %v899 = vpow.pop %v898
        %v900 = vmul.f32 %v844, 1.442695
        %v901 = vpow.pop %v900
        %v902 = vmul.f32 %v845, 1.442695
        %v903 = vpow.pop %v902
        %v904 = vmul.f32 %v846, 1.442695
        %v905 = vpow.pop %v904
        %v906 = vmul.f32 %v847, 1.442695
        %v907 = vpow.pop %v906
        %v908 = vmul.f32 %v848, 1.442695
        %v909 = vpow.pop %v908
        %v910 = vmul.f32 %v849, 1.442695
        %v911 = vpow.pop %v910
        %v912 = vmul.f32 %v850, 1.442695
        %v913 = vpow.pop %v912
        %v914 = vmul.f32 %v851, 1.442695
        %v915 = vpow.pop %v914
        %916 = vadd.xlane.f32.xlu0 %v853
        %v917 = vpop.xlane.xlu0 %916
        %918 = vadd.xlane.f32.xlu0 %v855
        %v919 = vpop.xlane.xlu0 %918
        %920 = vadd.xlane.f32.xlu0 %v857
        %v921 = vpop.xlane.xlu0 %920
        %922 = vadd.xlane.f32.xlu0 %v859
        %v923 = vpop.xlane.xlu0 %922
        %924 = vadd.xlane.f32.xlu0 %v861
        %v925 = vpop.xlane.xlu0 %924
        %926 = vadd.xlane.f32.xlu0 %v863
        %v927 = vpop.xlane.xlu0 %926
        %928 = vadd.xlane.f32.xlu0 %v865
        %v929 = vpop.xlane.xlu0 %928
        %930 = vadd.xlane.f32.xlu0 %v867
        %v931 = vpop.xlane.xlu0 %930
        %932 = vadd.xlane.f32.xlu0 %v869
        %v933 = vpop.xlane.xlu0 %932
        %934 = vadd.xlane.f32.xlu0 %v871
        %v935 = vpop.xlane.xlu0 %934
        %936 = vadd.xlane.f32.xlu0 %v873
        %v937 = vpop.xlane.xlu0 %936
        %938 = vadd.xlane.f32.xlu0 %v875
        %v939 = vpop.xlane.xlu0 %938
        %940 = vadd.xlane.f32.xlu0 %v877
        %v941 = vpop.xlane.xlu0 %940
        %942 = vadd.xlane.f32.xlu0 %v879
        %v943 = vpop.xlane.xlu0 %942
        %944 = vadd.xlane.f32.xlu0 %v881
        %v945 = vpop.xlane.xlu0 %944
        %946 = vadd.xlane.f32.xlu0 %v883
        %v947 = vpop.xlane.xlu0 %946
        %948 = vadd.xlane.f32.xlu0 %v885
        %v949 = vpop.xlane.xlu0 %948
        %950 = vadd.xlane.f32.xlu0 %v887
        %v951 = vpop.xlane.xlu0 %950
        %952 = vadd.xlane.f32.xlu0 %v889
        %v953 = vpop.xlane.xlu0 %952
        %954 = vadd.xlane.f32.xlu0 %v891
        %v955 = vpop.xlane.xlu0 %954
        %956 = vadd.xlane.f32.xlu0 %v893
        %v957 = vpop.xlane.xlu0 %956
        %958 = vadd.xlane.f32.xlu0 %v895
        %v959 = vpop.xlane.xlu0 %958
        %960 = vadd.xlane.f32.xlu0 %v897
        %v961 = vpop.xlane.xlu0 %960
        %962 = vadd.xlane.f32.xlu0 %v899
        %v963 = vpop.xlane.xlu0 %962
        %964 = vadd.xlane.f32.xlu0 %v901
        %v965 = vpop.xlane.xlu0 %964
        %966 = vadd.xlane.f32.xlu0 %v903
        %v967 = vpop.xlane.xlu0 %966
        %968 = vadd.xlane.f32.xlu0 %v905
        %v969 = vpop.xlane.xlu0 %968
        %970 = vadd.xlane.f32.xlu0 %v907
        %v971 = vpop.xlane.xlu0 %970
        %972 = vadd.xlane.f32.xlu0 %v909
        %v973 = vpop.xlane.xlu0 %972
        %974 = vadd.xlane.f32.xlu0 %v911
        %v975 = vpop.xlane.xlu0 %974
        %976 = vadd.xlane.f32.xlu0 %v913
        %v977 = vpop.xlane.xlu0 %976
        %978 = vadd.xlane.f32.xlu0 %v915
        %v979 = vpop.xlane.xlu0 %978
        %v980 = vrcp.pop %v917
        %v981 = vmul.f32 %v853, %v980
        %v982 = vrcp.pop %v919
        %v983 = vmul.f32 %v855, %v982
        %v984 = vrcp.pop %v921
        %v985 = vmul.f32 %v857, %v984
        %v986 = vrcp.pop %v923
        %v987 = vmul.f32 %v859, %v986
        %v988 = vrcp.pop %v925
        %v989 = vmul.f32 %v861, %v988
        %v990 = vrcp.pop %v927
        %v991 = vmul.f32 %v863, %v990
        %v992 = vrcp.pop %v929
        %v993 = vmul.f32 %v865, %v992
        %v994 = vrcp.pop %v931
        %v995 = vmul.f32 %v867, %v994
        %v996 = vrcp.pop %v933
        %v997 = vmul.f32 %v869, %v996
        %v998 = vrcp.pop %v935
        %v999 = vmul.f32 %v871, %v998
        %v1000 = vrcp.pop %v937
        %v1001 = vmul.f32 %v873, %v1000
        %v1002 = vrcp.pop %v939
        %v1003 = vmul.f32 %v875, %v1002
        %v1004 = vrcp.pop %v941
        %v1005 = vmul.f32 %v877, %v1004
        %v1006 = vrcp.pop %v943
        %v1007 = vmul.f32 %v879, %v1006
        %v1008 = vrcp.pop %v945
        %v1009 = vmul.f32 %v881, %v1008
        %v1010 = vrcp.pop %v947
        %v1011 = vmul.f32 %v883, %v1010
        %v1012 = vrcp.pop %v949
        %v1013 = vmul.f32 %v885, %v1012
        %v1014 = vrcp.pop %v951
        %v1015 = vmul.f32 %v887, %v1014
        %v1016 = vrcp.pop %v953
        %v1017 = vmul.f32 %v889, %v1016
        %v1018 = vrcp.pop %v955
        %v1019 = vmul.f32 %v891, %v1018
        %v1020 = vrcp.pop %v957
        %v1021 = vmul.f32 %v893, %v1020
        %v1022 = vrcp.pop %v959
        %v1023 = vmul.f32 %v895, %v1022
        %v1024 = vrcp.pop %v961
        %v1025 = vmul.f32 %v897, %v1024
        %v1026 = vrcp.pop %v963
        %v1027 = vmul.f32 %v899, %v1026
        %v1028 = vrcp.pop %v965
        %v1029 = vmul.f32 %v901, %v1028
        %v1030 = vrcp.pop %v967
        %v1031 = vmul.f32 %v903, %v1030
        %v1032 = vrcp.pop %v969
        %v1033 = vmul.f32 %v905, %v1032
        %v1034 = vrcp.pop %v971
        %v1035 = vmul.f32 %v907, %v1034
        %v1036 = vrcp.pop %v973
        %v1037 = vmul.f32 %v909, %v1036
        %v1038 = vrcp.pop %v975
        %v1039 = vmul.f32 %v911, %v1038
        %v1040 = vrcp.pop %v977
        %v1041 = vmul.f32 %v913, %v1040
        %v1042 = vrcp.pop %v979
        %v1043 = vmul.f32 %v915, %v1042
        %v1044 = vld [vmem:[%s236] sm:$0xff]
        %v1045 = vld [vmem:[%s236 + $0x8] sm:$0xff]
        %v1046 = vld [vmem:[%s236 + $0x10] sm:$0xff]
        %v1047 = vld [vmem:[%s236 + $0x18] sm:$0xff]
        %v1048 = vld [vmem:[%s236 + $0x20] sm:$0xff]
        %v1049 = vld [vmem:[%s236 + $0x28] sm:$0xff]
        %v1050 = vld [vmem:[%s236 + $0x30] sm:$0xff]
        %v1051 = vld [vmem:[%s236 + $0x38] sm:$0xff]
        %1052 = vmatprep.subr.mxu0 0.0
        %1053 = vmatpush1.xpose.msra.mxu0 %v981
        %1054 = vmatprep.subr.mxu0 0.0
        %1055 = vmatpush1.xpose.msra.mxu0 %v983
        %1056 = vmatprep.subr.mxu0 0.0
        %1057 = vmatpush1.xpose.msra.mxu0 %v985
        %1058 = vmatprep.subr.mxu0 0.0
        %1059 = vmatpush1.xpose.msra.mxu0 %v987
        %1060 = vmatprep.subr.mxu0 0.0
        %1061 = vmatpush1.xpose.msra.mxu0 %v989
        %1062 = vmatprep.subr.mxu0 0.0
        %1063 = vmatpush1.xpose.msra.mxu0 %v991
        %1064 = vmatprep.subr.mxu0 0.0
        %1065 = vmatpush1.xpose.msra.mxu0 %v993
        %1066 = vmatprep.subr.mxu0 0.0
        %1067 = vmatpush1.xpose.msra.mxu0 %v995
        %1068 = vmatprep.subr.mxu0 0.0
        %1069 = vmatpush1.xpose.msra.mxu0 %v997
        %1070 = vmatprep.subr.mxu0 0.0
        %1071 = vmatpush1.xpose.msra.mxu0 %v999
        %1072 = vmatprep.subr.mxu0 0.0
        %1073 = vmatpush1.xpose.msra.mxu0 %v1001
        %1074 = vmatprep.subr.mxu0 0.0
        %1075 = vmatpush1.xpose.msra.mxu0 %v1003
        %1076 = vmatprep.subr.mxu0 0.0
        %1077 = vmatpush1.xpose.msra.mxu0 %v1005
        %1078 = vmatprep.subr.mxu0 0.0
        %1079 = vmatpush1.xpose.msra.mxu0 %v1007
        %1080 = vmatprep.subr.mxu0 0.0
        %1081 = vmatpush1.xpose.msra.mxu0 %v1009
        %1082 = vmatprep.subr.mxu0 0.0
        %1083 = vmatpush1.xpose.msra.mxu0 %v1011
        %1084 = vmatprep.subr.mxu0 0.0
        %1085 = vmatpush1.xpose.msra.mxu0 0.0
        %1086 = vmatprep.subr.mxu0 0.0
        %1087 = vmatpush1.xpose.msra.mxu0 0.0
        %1088 = vmatprep.subr.mxu0 0.0
        %1089 = vmatpush1.xpose.msra.mxu0 0.0
        %1090 = vmatprep.subr.mxu0 0.0
        %1091 = vmatpush1.xpose.msra.mxu0 0.0
        %1092 = vmatprep.subr.mxu0 0.0
        %1093 = vmatpush1.xpose.msra.mxu0 0.0
        %1094 = vmatprep.subr.mxu0 0.0
        %1095 = vmatpush1.xpose.msra.mxu0 0.0
        %1096 = vmatprep.subr.mxu0 0.0
        %1097 = vmatpush1.xpose.msra.mxu0 0.0
        %1098 = vmatprep.subr.mxu0 0.0
        %1099 = vmatpush1.xpose.msra.mxu0 0.0
        %1100 = vmatprep.subr.mxu0 0.0
        %1101 = vmatpush1.xpose.msra.mxu0 0.0
        %1102 = vmatprep.subr.mxu0 0.0
        %1103 = vmatpush1.xpose.msra.mxu0 0.0
        %1104 = vmatprep.subr.mxu0 0.0
        %1105 = vmatpush1.xpose.msra.mxu0 0.0
        %1106 = vmatprep.subr.mxu0 0.0
        %1107 = vmatpush1.xpose.msra.mxu0 0.0
        %1108 = vmatprep.subr.mxu0 0.0
        %1109 = vmatpush1.xpose.msra.mxu0 0.0
        %1110 = vmatprep.subr.mxu0 0.0
        %1111 = vmatpush1.xpose.msra.mxu0 0.0
        %1112 = vmatprep.subr.mxu0 0.0
        %1113 = vmatpush1.xpose.msra.mxu0 0.0
        %1114 = vmatprep.subr.mxu0 0.0
        %1115 = vmatpush1.xpose.msra.mxu0 0.0
        %1116 = vmatprep.mubr.f32.mxu0 0.0
        %1117 = vmatmul.mubr.f32.gmra.mrb[0].mxu0 %v1044
        %v1118 = vpop.f32.mrb[0].mxu0
        %v1119 = vadd.f32 0.0, %v1118
        %v1120 = vpop.f32.mrb[0].mxu0
        %1121 = vmatprep.mubr.f32.mxu0 0.0
        %1122 = vmatmul.mubr.f32.gmra.mrb[0].mxu0 %v1045
        %v1123 = vpop.f32.mrb[0].mxu0
        %v1124 = vadd.f32 0.0, %v1123
        %v1125 = vpop.f32.mrb[0].mxu0
        %1126 = vmatprep.mubr.f32.mxu0 0.0
        %1127 = vmatmul.mubr.f32.gmra.mrb[0].mxu0 %v1046
        %v1128 = vpop.f32.mrb[0].mxu0
        %v1129 = vadd.f32 0.0, %v1128
        %v1130 = vpop.f32.mrb[0].mxu0
        %1131 = vmatprep.mubr.f32.mxu0 0.0
        %1132 = vmatmul.mubr.f32.gmra.mrb[0].mxu0 %v1047
        %v1133 = vpop.f32.mrb[0].mxu0
        %v1134 = vadd.f32 0.0, %v1133
        %v1135 = vpop.f32.mrb[0].mxu0
        %1136 = vdwg.mxu0
        %1137 = vmatprep.subr.mxu0 0.0
        %1138 = vmatpush1.xpose.msra.mxu0 %v1013
        %1139 = vmatprep.subr.mxu0 0.0
        %1140 = vmatpush1.xpose.msra.mxu0 %v1015
        %1141 = vmatprep.subr.mxu0 0.0
        %1142 = vmatpush1.xpose.msra.mxu0 %v1017
        %1143 = vmatprep.subr.mxu0 0.0
        %1144 = vmatpush1.xpose.msra.mxu0 %v1019
        %1145 = vmatprep.subr.mxu0 0.0
        %1146 = vmatpush1.xpose.msra.mxu0 %v1021
        %1147 = vmatprep.subr.mxu0 0.0
        %1148 = vmatpush1.xpose.msra.mxu0 %v1023
        %1149 = vmatprep.subr.mxu0 0.0
        %1150 = vmatpush1.xpose.msra.mxu0 %v1025
        %1151 = vmatprep.subr.mxu0 0.0
        %1152 = vmatpush1.xpose.msra.mxu0 %v1027
        %1153 = vmatprep.subr.mxu0 0.0
        %1154 = vmatpush1.xpose.msra.mxu0 %v1029
        %1155 = vmatprep.subr.mxu0 0.0
        %1156 = vmatpush1.xpose.msra.mxu0 %v1031
        %1157 = vmatprep.subr.mxu0 0.0
        %1158 = vmatpush1.xpose.msra.mxu0 %v1033
        %1159 = vmatprep.subr.mxu0 0.0
        %1160 = vmatpush1.xpose.msra.mxu0 %v1035
        %1161 = vmatprep.subr.mxu0 0.0
        %1162 = vmatpush1.xpose.msra.mxu0 %v1037
        %1163 = vmatprep.subr.mxu0 0.0
        %1164 = vmatpush1.xpose.msra.mxu0 %v1039
        %1165 = vmatprep.subr.mxu0 0.0
        %1166 = vmatpush1.xpose.msra.mxu0 %v1041
        %1167 = vmatprep.subr.mxu0 0.0
        %1168 = vmatpush1.xpose.msra.mxu0 %v1043
        %1169 = vmatprep.subr.mxu0 0.0
        %1170 = vmatpush1.xpose.msra.mxu0 0.0
        %1171 = vmatprep.subr.mxu0 0.0
        %1172 = vmatpush1.xpose.msra.mxu0 0.0
        %1173 = vmatprep.subr.mxu0 0.0
        %1174 = vmatpush1.xpose.msra.mxu0 0.0
        %1175 = vmatprep.subr.mxu0 0.0
        %1176 = vmatpush1.xpose.msra.mxu0 0.0
        %1177 = vmatprep.subr.mxu0 0.0
        %1178 = vmatpush1.xpose.msra.mxu0 0.0
        %1179 = vmatprep.subr.mxu0 0.0
        %1180 = vmatpush1.xpose.msra.mxu0 0.0
        %1181 = vmatprep.subr.mxu0 0.0
        %1182 = vmatpush1.xpose.msra.mxu0 0.0
        %1183 = vmatprep.subr.mxu0 0.0
        %1184 = vmatpush1.xpose.msra.mxu0 0.0
        %1185 = vmatprep.subr.mxu0 0.0
        %1186 = vmatpush1.xpose.msra.mxu0 0.0
        %1187 = vmatprep.subr.mxu0 0.0
        %1188 = vmatpush1.xpose.msra.mxu0 0.0
        %1189 = vmatprep.subr.mxu0 0.0
        %1190 = vmatpush1.xpose.msra.mxu0 0.0
        %1191 = vmatprep.subr.mxu0 0.0
        %1192 = vmatpush1.xpose.msra.mxu0 0.0
        %1193 = vmatprep.subr.mxu0 0.0
        %1194 = vmatpush1.xpose.msra.mxu0 0.0
        %1195 = vmatprep.subr.mxu0 0.0
        %1196 = vmatpush1.xpose.msra.mxu0 0.0
        %1197 = vmatprep.subr.mxu0 0.0
        %1198 = vmatpush1.xpose.msra.mxu0 0.0
        %1199 = vmatprep.subr.mxu0 0.0
        %1200 = vmatpush1.xpose.msra.mxu0 0.0
        %1201 = vmatprep.mubr.f32.mxu0 0.0
        %1202 = vmatmul.mubr.f32.gmra.mrb[0].mxu0 %v1048
        %v1203 = vpop.f32.mrb[0].mxu0
        %v1204 = vadd.f32 0.0, %v1203
        %v1205 = vpop.f32.mrb[0].mxu0
        %1206 = vmatprep.mubr.f32.mxu0 0.0
        %1207 = vmatmul.mubr.f32.gmra.mrb[0].mxu0 %v1049
        %v1208 = vpop.f32.mrb[0].mxu0
        %v1209 = vadd.f32 0.0, %v1208
        %v1210 = vpop.f32.mrb[0].mxu0
        %1211 = vmatprep.mubr.f32.mxu0 0.0
        %1212 = vmatmul.mubr.f32.gmra.mrb[0].mxu0 %v1050
        %v1213 = vpop.f32.mrb[0].mxu0
        %v1214 = vadd.f32 0.0, %v1213
        %v1215 = vpop.f32.mrb[0].mxu0
        %1216 = vmatprep.mubr.f32.mxu0 0.0
        %1217 = vmatmul.mubr.f32.gmra.mrb[0].mxu0 %v1051
        %v1218 = vpop.f32.mrb[0].mxu0
        %v1219 = vadd.f32 0.0, %v1218
        %v1220 = vpop.f32.mrb[0].mxu0
        %1221 = vdwg.mxu0
        %1222 = vst [vmem:[%s268] sm:$0xff] %v1119
        %1223 = vst [vmem:[%s268 + $0x8] sm:$0xff] %v1124
        %1224 = vst [vmem:[%s268 + $0x10] sm:$0xff] %v1129
        %1225 = vst [vmem:[%s268 + $0x18] sm:$0xff] %v1134
        %1226 = vst [vmem:[%s268 + $0x20] sm:$0xff] %v1204
        %1227 = vst [vmem:[%s268 + $0x28] sm:$0xff] %v1209
        %1228 = vst [vmem:[%s268 + $0x30] sm:$0xff] %v1214
        %1229 = vst [vmem:[%s268 + $0x38] sm:$0xff] %v1219
        %s1230 = sand.u32 %s109, 1
        %s1231 = scalar_lea.sflag [#allocation4], %s1230
        %s1232 = sand.u32 %s109, 1
        %s1233 = smul.addr %s1232, 64
        %s1234 = scalar_lea.vmem [#allocation8], %s1233
        // Predicated region
        $region45: #{tpu_custom_call.1} parent=31 // pred_check
          %p1235 = pneg %p119
        $region46: #{tpu_custom_call.1} parent=31 // pred_check_branch
          %1237 = sbr.rel (%p1235) target = $region48
        $region47: #{tpu_custom_call.1} parent=31 // pred_region
          %s1238 = smul.u32 2, %s23
          %s1240 = ssub.s32 1024, 1024
          %1241 = vsyncadd %s1231, %s1240
          %s1242 = smul.addr %s1238, 4
          %s1243 = smul.addr %s1242, 128
          %s1244 = scalar_lea.hbm %s3, %s1243
          %s1245 = sshll.u32 %s1234, 4
          %s1246 = int_to_ptr.vmem [resolvable:$true] %s1245
          %1251 = dma.vmem_to_hbm [thread:$0]  %s1246, 1024, %s1244, %s1231, 128, 128, 8
        $region48: #{tpu_custom_call.1} parent=31 // pred_fallthru
          _
      $region32: #{tpu_custom_call.1} parent=5 // pred_fallthru
        _
      %p1252 = scmp.le.s32.totalorder 2, %s18
      // Predicated region
      $region49: #{tpu_custom_call.1} parent=5 // pred_check
        %p1253 = pneg %p1252
      $region50: #{tpu_custom_call.1} parent=5 // pred_check_branch
        %1255 = sbr.rel (%p1253) target = $region52
      $region51: #{tpu_custom_call.1} parent=5 // pred_region
        %s1256 = ssub.s32 %s18, 2
        // Predicated region
        $region53: #{tpu_custom_call.1} parent=51 // pred_check
          %p1257 = pneg %p125
        $region54: #{tpu_custom_call.1} parent=51 // pred_check_branch
          %1259 = sbr.rel (%p1257) target = $region56
        $region55: #{tpu_custom_call.1} parent=51 // pred_region
          %s1260 = sand.u32 %s110, 1
          %s1261 = scalar_lea.sflag [#allocation4], %s1260
          %s1262 = sand.u32 %s110, 1
          %s1263 = smul.addr %s1262, 64
          %s1264 = scalar_lea.vmem [#allocation8], %s1263
          %1265 = dma.done %s1261, 1024
        $region56: #{tpu_custom_call.1} parent=51 // pred_fallthru
          _
      $region52: #{tpu_custom_call.1} parent=5 // pred_fallthru
        _
    $region6: #{tpu_custom_call.1} parent=1 // loop_footer
      %s22 = sadd.s32 1, %s18
    $region7: #{tpu_custom_call.1} parent=1 // loop_footer_branch
      %17 = sbr.rel target = $region3
    $region8: #{tpu_custom_call.1} parent=1 // loop_exit
      _
    %1266 = vsyncpa [#allocation3], 1
    %s1267 = scalar_lea.sflag [#allocation3], 1
    %1268 = vsyncpa %s1267, 1
    %1269 = vsyncpa [#allocation6], 1
    %s1270 = scalar_lea.sflag [#allocation6], 1
    %1271 = vsyncpa %s1270, 1
    %1272 = vsyncpa [#allocation4], 1
    %s1273 = scalar_lea.sflag [#allocation4], 1
    %1274 = vsyncpa %s1273, 1

</llo_original>
